<compile_context>
chip_gen: v7x
topology: tpu7x:2x2x1
jax: 0.10.0
libtpu: 0.0.40
codegen_flags: <defaults>
</compile_context>

<pallas_src>
import functools

import jax
import jax.numpy as jnp
from jax import lax
from jax.experimental import pallas as pl
from jax.experimental.pallas import tpu as pltpu


_OUT_LANES = 128   # lane-dense packed logits slab width (one full vreg lane row)
_SUBLANE = 8       # pad batch to a multiple of 8 sublanes


# ----------------------------------------------------------------------------
# Fused kernel: token ids -> packed logits slab, one kernel invocation.
# ----------------------------------------------------------------------------
def _fused_forward_kernel(ids_ref, embed_ref, wproj_ref, bias_ref, heads_ref,
                          out_ref, *, seq_len, vocab):
    """
    ids_ref   : (Bp, S)   int32 token ids (rows >= true B are padding)
    embed_ref : (V, E)    embedding table
    wproj_ref : (E, D)    encoder projection, pre-transposed (torch weight is (D, E))
    bias_ref  : (1, D)    encoder projection bias
    heads_ref : (D, 128)  pre-normalized, sigma-folded, transposed cosine heads:
                          cols [0:C_total] = global head, [C_total:C_total+T*C] = locals
    out_ref   : (Bp, 128) packed logits slab
    """
    ids = ids_ref[...]                                            # (Bp, S) int32
    bp = ids.shape[0]

    # --- embedding gather + mean-pool as one-hot token-count matmul ------------
    v_iota = lax.broadcasted_iota(jnp.int32, (bp, vocab), 1)      # (Bp, V)
    counts = jnp.zeros((bp, vocab), jnp.float32)
    for s in range(seq_len):                                      # static unroll (tiny S)
        counts = counts + (ids[:, s:s + 1] == v_iota).astype(jnp.float32)
    # 1/S is a compile-time constant: folding it here makes the matmul the mean-pool.
    pooled = jnp.dot(counts * (1.0 / seq_len), embed_ref[...],
                     preferred_element_type=jnp.float32)          # (Bp, E)

    # --- encoder projection + tanh (Roberta-pooler-like) -----------------------
    h = jnp.dot(pooled, wproj_ref[...], preferred_element_type=jnp.float32)
    feats = jnp.tanh(h + bias_ref[...])                           # (Bp, D)

    # --- cosine heads: only the features need normalizing (weights were
    #     pre-normalized and sigma-folded at init).  rsqrt(max(sumsq, eps^2)) is
    #     equivalent to x / max(||x||, eps) up to eps semantics (clamps sumsq at
    #     1e-24 instead of ||x|| at 1e-12) -- negligible, documented.
    sumsq = jnp.sum(feats * feats, axis=-1, keepdims=True)        # (Bp, 1)
    xn = feats * lax.rsqrt(jnp.maximum(sumsq, 1e-24))             # (Bp, D)

    # single lane-dense matmul -> one unmasked (Bp, 128) store
    out_ref[...] = jnp.dot(xn, heads_ref[...],
                           preferred_element_type=jnp.float32)    # (Bp, 128)


# ----------------------------------------------------------------------------
# SimpleLLMNet forward (all hot-path work in the single fused Pallas kernel)
# ----------------------------------------------------------------------------
class SimpleLLMNetPallas:
    def __init__(self, key, *, vocab=32, emb_dim=32, feature_dim=32,
                 num_tasks=2, classes_per_task=4):
        self.feature_dim = feature_dim
        self.num_tasks = num_tasks
        self.classes_per_task = classes_per_task
        total_classes = num_tasks * classes_per_task

        keys = jax.random.split(key, 5)
        # --- raw parameters (torch layouts: Linear/CosineLinear weight = (out, in)) ---
        self.embed_table = jax.random.normal(keys[0], (vocab, emb_dim), jnp.float32) * 0.02
        self.w_proj = jax.random.normal(keys[1], (feature_dim, emb_dim), jnp.float32) * 0.02
        self.b_proj = jnp.zeros((1, feature_dim), jnp.float32)
        # global_fc : CosineLinear(feature_dim, total_classes)
        self.global_w = jax.random.normal(keys[2], (total_classes, feature_dim), jnp.float32) * 0.02
        self.global_sigma = jnp.array([1.0], jnp.float32)
        # multi_local_fcs : one CosineLinear(feature_dim, classes_per_task) per task
        self.local_w = jax.random.normal(
            keys[3], (num_tasks, classes_per_task, feature_dim), jnp.float32) * 0.02
        self.local_sigma = jnp.ones((num_tasks, 1), jnp.float32)

        # --- kernel-ready constants (computed ONCE at init, not per call) ---------
        eps = 1e-12

        def _row_normalize(w):
            n = jnp.sqrt(jnp.sum(w * w, axis=1, keepdims=True))
            return w / jnp.maximum(n, eps)

        # encoder projection pre-transposed to (E, D) for a plain (B,E)@(E,D) matmul
        self.w_proj_t = jnp.asarray(self.w_proj.T)

        # pre-normalize weight rows and fold sigma (per-task sigma preserved for locals)
        g = _row_normalize(self.global_w) * self.global_sigma[0]               # (C_total, D)
        l = _row_normalize(self.local_w.reshape(total_classes, feature_dim))
        l = l * jnp.repeat(self.local_sigma, classes_per_task, axis=0)         # (T*C, D)
        heads = jnp.concatenate([g, l], axis=0)                                # (C_total + T*C, D)
        n_cols = heads.shape[0]
        assert n_cols <= _OUT_LANES, "packed head columns must fit in one 128-lane slab"
        self._n_head_cols = n_cols
        # pack transposed into a lane-dense, zero-padded (D, 128) matrix
        self.w_heads = jnp.zeros((feature_dim, _OUT_LANES), jnp.float32).at[
            :, :n_cols].set(heads.T)

    # fused llm + global_fc + multi_local_fcs hot path
    def _fused(self, ids_pad, seq_len):
        bp = ids_pad.shape[0]
        vocab = self.embed_table.shape[0]
        kernel = functools.partial(_fused_forward_kernel, seq_len=seq_len, vocab=vocab)
        vmem = pl.BlockSpec(memory_space=pltpu.MemorySpace.VMEM)
        return pl.pallas_call(
            kernel,
            out_shape=jax.ShapeDtypeStruct((bp, _OUT_LANES), jnp.float32),
            in_specs=[vmem, vmem, vmem, vmem, vmem],
            out_specs=vmem,
        )(ids_pad, self.embed_table, self.w_proj_t, self.b_proj, self.w_heads)

    def forward(self, token_ids, cur_stage, is_all=False):
        B, S = token_ids.shape
        bp = ((B + _SUBLANE - 1) // _SUBLANE) * _SUBLANE
        ids_pad = jnp.zeros((bp, S), jnp.int32).at[:B].set(token_ids.astype(jnp.int32))

        slab = self._fused(ids_pad, S)                                  # (bp, 128)

        c_total = self.num_tasks * self.classes_per_task
        first_out = slab[:B, :c_total]                                  # (B, C_total)
        # TODO(synk): MultiLocalCosineLinear source not provided; routing here uses
        # cur_stage to select the local head (all heads concatenated when is_all).
        base = c_total
        if is_all:
            second_out = slab[:B, base:base + c_total]                  # (B, T*C)
        else:
            lo = base + cur_stage * self.classes_per_task
            second_out = slab[:B, lo:lo + self.classes_per_task]        # (B, C)
        return first_out, second_out


# ----------------------------------------------------------------------------
# Pure-JAX reference of the original semantics (for a structural sanity check)
# ----------------------------------------------------------------------------
def _reference_forward(net, token_ids, cur_stage, is_all):
    emb = jnp.take(net.embed_table, token_ids, axis=0)          # (B, S, E)
    pooled = jnp.mean(emb, axis=1)                              # (B, E)
    feats = jnp.tanh(pooled @ net.w_proj.T + net.b_proj)        # (B, D)

    def cos(x, w, sigma):
        xn = x / jnp.maximum(jnp.linalg.norm(x, axis=1, keepdims=True), 1e-12)
        wn = w / jnp.maximum(jnp.linalg.norm(w, axis=1, keepdims=True), 1e-12)
        return sigma * (xn @ wn.T)

    first = cos(feats, net.global_w, net.global_sigma[0])
    if is_all:
        parts = [cos(feats, net.local_w[t], net.local_sigma[t, 0])
                 for t in range(net.num_tasks)]
        second = jnp.concatenate(parts, axis=-1)
    else:
        second = cos(feats, net.local_w[cur_stage], net.local_sigma[cur_stage, 0])
    return first, second


if __name__ == "__main__":
    key = jax.random.PRNGKey(0)
    k_param, k_tok = jax.random.split(key)

    net = SimpleLLMNetPallas(k_param, vocab=32, emb_dim=32, feature_dim=32,
                             num_tasks=2, classes_per_task=4)

    B, S = 2, 8
    token_ids = jax.random.randint(k_tok, (B, S), 0, 32, dtype=jnp.int32)

    first_out, second_out = net.forward(token_ids, cur_stage=1, is_all=False)
    first_out = jax.block_until_ready(first_out)
    second_out = jax.block_until_ready(second_out)

    assert first_out.shape == (B, 8), first_out.shape
    assert second_out.shape == (B, 4), second_out.shape
    assert jnp.all(jnp.isfinite(first_out)) and jnp.all(jnp.isfinite(second_out))

    # also exercise the is_all path
    first_all, second_all = net.forward(token_ids, cur_stage=1, is_all=True)
    second_all = jax.block_until_ready(second_all)
    assert second_all.shape == (B, 8), second_all.shape

    # structural sanity check against a plain-JAX reference (loose tol: MXU precision)
    ref_first, ref_second = _reference_forward(net, token_ids, 1, False)
    _, ref_second_all = _reference_forward(net, token_ids, 1, True)
    assert jnp.allclose(first_out, ref_first, atol=5e-3, rtol=5e-2)
    assert jnp.allclose(second_out, ref_second, atol=5e-3, rtol=5e-2)
    assert jnp.allclose(second_all, ref_second_all, atol=5e-3, rtol=5e-2)

    print("KERNEL_OK")
</pallas_src>

<mosaic_0001>
module attributes {stable_mosaic.version = 11 : i64} {
  func.func @_fused_forward_kernel(%arg0: memref<8x8xi32, #tpu.memory_space<vmem>>, %arg1: memref<32x32xf32, #tpu.memory_space<vmem>>, %arg2: memref<32x32xf32, #tpu.memory_space<vmem>>, %arg3: memref<1x32xf32, #tpu.memory_space<vmem>>, %arg4: memref<32x128xf32, #tpu.memory_space<vmem>>, %arg5: memref<8x128xf32, #tpu.memory_space<vmem>>) attributes {dimension_semantics = [], scalar_prefetch = 0 : i64, scratch_operands = 0 : i64, tpu.core_type = #tpu.core_type<tc>} {
    %c0 = arith.constant 0 : index
    %c0_0 = arith.constant 0 : index
    %0 = vector.load %arg0[%c0, %c0_0] : memref<8x8xi32, #tpu.memory_space<vmem>>, vector<8x8xi32>
    %1 = tpu.iota {dimensions = array<i32: 1>} : vector<8x32xi32>
    %cst = arith.constant 0.000000e+00 : f32
    %2 = vector.broadcast %cst : f32 to vector<8x32xf32>
    %3 = vector.extract_strided_slice %0 {offsets = [0, 0], sizes = [8, 1], strides = [1, 1]} : vector<8x8xi32> to vector<8x1xi32>
    %4 = vector.broadcast %3 : vector<8x1xi32> to vector<8x32xi32>
    %5 = arith.cmpi eq, %4, %1 : vector<8x32xi32>
    %6 = arith.extui %5 : vector<8x32xi1> to vector<8x32xi32>
    %7 = arith.sitofp %6 : vector<8x32xi32> to vector<8x32xf32>
    %8 = arith.addf %2, %7 : vector<8x32xf32>
    %9 = vector.extract_strided_slice %0 {offsets = [0, 1], sizes = [8, 1], strides = [1, 1]} : vector<8x8xi32> to vector<8x1xi32>
    %10 = vector.broadcast %9 : vector<8x1xi32> to vector<8x32xi32>
    %11 = arith.cmpi eq, %10, %1 : vector<8x32xi32>
    %12 = arith.extui %11 : vector<8x32xi1> to vector<8x32xi32>
    %13 = arith.sitofp %12 : vector<8x32xi32> to vector<8x32xf32>
    %14 = arith.addf %8, %13 : vector<8x32xf32>
    %15 = vector.extract_strided_slice %0 {offsets = [0, 2], sizes = [8, 1], strides = [1, 1]} : vector<8x8xi32> to vector<8x1xi32>
    %16 = vector.broadcast %15 : vector<8x1xi32> to vector<8x32xi32>
    %17 = arith.cmpi eq, %16, %1 : vector<8x32xi32>
    %18 = arith.extui %17 : vector<8x32xi1> to vector<8x32xi32>
    %19 = arith.sitofp %18 : vector<8x32xi32> to vector<8x32xf32>
    %20 = arith.addf %14, %19 : vector<8x32xf32>
    %21 = vector.extract_strided_slice %0 {offsets = [0, 3], sizes = [8, 1], strides = [1, 1]} : vector<8x8xi32> to vector<8x1xi32>
    %22 = vector.broadcast %21 : vector<8x1xi32> to vector<8x32xi32>
    %23 = arith.cmpi eq, %22, %1 : vector<8x32xi32>
    %24 = arith.extui %23 : vector<8x32xi1> to vector<8x32xi32>
    %25 = arith.sitofp %24 : vector<8x32xi32> to vector<8x32xf32>
    %26 = arith.addf %20, %25 : vector<8x32xf32>
    %27 = vector.extract_strided_slice %0 {offsets = [0, 4], sizes = [8, 1], strides = [1, 1]} : vector<8x8xi32> to vector<8x1xi32>
    %28 = vector.broadcast %27 : vector<8x1xi32> to vector<8x32xi32>
    %29 = arith.cmpi eq, %28, %1 : vector<8x32xi32>
    %30 = arith.extui %29 : vector<8x32xi1> to vector<8x32xi32>
    %31 = arith.sitofp %30 : vector<8x32xi32> to vector<8x32xf32>
    %32 = arith.addf %26, %31 : vector<8x32xf32>
    %33 = vector.extract_strided_slice %0 {offsets = [0, 5], sizes = [8, 1], strides = [1, 1]} : vector<8x8xi32> to vector<8x1xi32>
    %34 = vector.broadcast %33 : vector<8x1xi32> to vector<8x32xi32>
    %35 = arith.cmpi eq, %34, %1 : vector<8x32xi32>
    %36 = arith.extui %35 : vector<8x32xi1> to vector<8x32xi32>
    %37 = arith.sitofp %36 : vector<8x32xi32> to vector<8x32xf32>
    %38 = arith.addf %32, %37 : vector<8x32xf32>
    %39 = vector.extract_strided_slice %0 {offsets = [0, 6], sizes = [8, 1], strides = [1, 1]} : vector<8x8xi32> to vector<8x1xi32>
    %40 = vector.broadcast %39 : vector<8x1xi32> to vector<8x32xi32>
    %41 = arith.cmpi eq, %40, %1 : vector<8x32xi32>
    %42 = arith.extui %41 : vector<8x32xi1> to vector<8x32xi32>
    %43 = arith.sitofp %42 : vector<8x32xi32> to vector<8x32xf32>
    %44 = arith.addf %38, %43 : vector<8x32xf32>
    %45 = vector.extract_strided_slice %0 {offsets = [0, 7], sizes = [8, 1], strides = [1, 1]} : vector<8x8xi32> to vector<8x1xi32>
    %46 = vector.broadcast %45 : vector<8x1xi32> to vector<8x32xi32>
    %47 = arith.cmpi eq, %46, %1 : vector<8x32xi32>
    %48 = arith.extui %47 : vector<8x32xi1> to vector<8x32xi32>
    %49 = arith.sitofp %48 : vector<8x32xi32> to vector<8x32xf32>
    %50 = arith.addf %44, %49 : vector<8x32xf32>
    %cst_1 = arith.constant 1.250000e-01 : f32
    %51 = vector.broadcast %cst_1 : f32 to vector<8x32xf32>
    %52 = arith.mulf %50, %51 : vector<8x32xf32>
    %c0_2 = arith.constant 0 : index
    %c0_3 = arith.constant 0 : index
    %53 = vector.load %arg1[%c0_2, %c0_3] : memref<32x32xf32, #tpu.memory_space<vmem>>, vector<32x32xf32>
    %cst_4 = arith.constant dense<0.000000e+00> : vector<8x32xf32>
    %54 = tpu.matmul %52, %53, %cst_4 {dimension_numbers = #tpu.dot_dimension_numbers<[1], [0], [0], [1], [0, 0, 1, 1], [], []>} : vector<8x32xf32>, vector<32x32xf32>, vector<8x32xf32> -> vector<8x32xf32>
    %c0_5 = arith.constant 0 : index
    %c0_6 = arith.constant 0 : index
    %55 = vector.load %arg2[%c0_5, %c0_6] : memref<32x32xf32, #tpu.memory_space<vmem>>, vector<32x32xf32>
    %cst_7 = arith.constant dense<0.000000e+00> : vector<8x32xf32>
    %56 = tpu.matmul %54, %55, %cst_7 {dimension_numbers = #tpu.dot_dimension_numbers<[1], [0], [0], [1], [0, 0, 1, 1], [], []>} : vector<8x32xf32>, vector<32x32xf32>, vector<8x32xf32> -> vector<8x32xf32>
    %c0_8 = arith.constant 0 : index
    %c0_9 = arith.constant 0 : index
    %57 = vector.load %arg3[%c0_8, %c0_9] : memref<1x32xf32, #tpu.memory_space<vmem>>, vector<1x32xf32>
    %58 = vector.broadcast %57 : vector<1x32xf32> to vector<8x32xf32>
    %59 = arith.addf %56, %58 : vector<8x32xf32>
    %60 = math.tanh %59 : vector<8x32xf32>
    %61 = arith.mulf %60, %60 : vector<8x32xf32>
    %cst_10 = arith.constant dense<0.000000e+00> : vector<8xf32>
    %62 = vector.multi_reduction <add>, %61, %cst_10 [1] : vector<8x32xf32> to vector<8xf32>
    %63 = vector.shape_cast %62 : vector<8xf32> to vector<8x1xf32>
    %cst_11 = arith.constant 1.000000e-24 : f32
    %64 = vector.broadcast %cst_11 : f32 to vector<8x1xf32>
    %65 = arith.maximumf %63, %64 : vector<8x1xf32>
    %66 = math.rsqrt %65 : vector<8x1xf32>
    %67 = vector.broadcast %66 : vector<8x1xf32> to vector<8x32xf32>
    %68 = arith.mulf %60, %67 : vector<8x32xf32>
    %c0_12 = arith.constant 0 : index
    %c0_13 = arith.constant 0 : index
    %69 = vector.load %arg4[%c0_12, %c0_13] : memref<32x128xf32, #tpu.memory_space<vmem>>, vector<32x128xf32>
    %cst_14 = arith.constant dense<0.000000e+00> : vector<8x128xf32>
    %70 = tpu.matmul %68, %69, %cst_14 {dimension_numbers = #tpu.dot_dimension_numbers<[1], [0], [0], [1], [0, 0, 1, 1], [], []>} : vector<8x32xf32>, vector<32x128xf32>, vector<8x128xf32> -> vector<8x128xf32>
    %c0_15 = arith.constant 0 : index
    %c0_16 = arith.constant 0 : index
    %71 = vector.load %arg5[%c0_15, %c0_16] : memref<8x128xf32, #tpu.memory_space<vmem>>, vector<8x128xf32>
    tpu.vector_store %arg5[%c0_15, %c0_16], %70 {strides = array<i32>} : memref<8x128xf32, #tpu.memory_space<vmem>>, vector<8x128xf32>,
    return
  }
}

</mosaic_0001>

<llo_original>
// kernel: tpu_custom_call.1
$region0: #{tpu_custom_call.1}
  #allocation0 [shape = 'u32[]', space=smem, size = 0x4, offset = 0x4, fixed_abs, tag = 'smem constant byte address 0x4 - core index']
  #allocation1 [shape = 'u32[144,128]{1,0:T(1,128)}', space=vmem, size = 0x12000, scoped, tag = 'internal scratch']
  %s0 = inlined_call_operand.hbm [shape: s32[8,8], index: 0, kind: input, shape index: {}]
  %s1 = inlined_call_operand.hbm [shape: f32[32,32], index: 1, kind: input, shape index: {}]
  %s2 = inlined_call_operand.hbm [shape: f32[32,32], index: 2, kind: input, shape index: {}]
  %s3 = inlined_call_operand.vmem [shape: f32[1,32], index: 3, kind: input, shape index: {}]
  %s4 = inlined_call_operand.hbm [shape: f32[32,128], index: 4, kind: input, shape index: {}]
  %s5 = inlined_call_operand.hbm [shape: f32[8,128], index: 5, kind: output, shape index: {}]
  %s6 = sld [smem:[#allocation0]]
  $region46: #{tpu_custom_call.1} parent=0
    _
  %s8 = ssub.s32 1, %s6
  %s9 = scalar_select 0, %s8, %s6
  $region1: #{tpu_custom_call.1} parent=0
    #allocation2 [shape = 'u8[4096]{0}', space=vmem, size = 0x1000, scoped, tag = 'input window, operand 0, single buffered']
    #allocation3 [shape = 's32[1]{0}', space=sflag, size = 0x4, scoped, tag = 'scoped memory for tpu_custom_call.1']
    #allocation4 [shape = 's32[1]{0}', space=sflag, size = 0x4, scoped, tag = 'scoped memory for tpu_custom_call.1']
    #allocation5 [shape = 'u8[16384]{0}', space=vmem, size = 0x4000, scoped, tag = 'input window, operand 1, single buffered']
    #allocation6 [shape = 's32[1]{0}', space=sflag, size = 0x4, scoped, tag = 'scoped memory for tpu_custom_call.1']
    #allocation7 [shape = 'u8[16384]{0}', space=vmem, size = 0x4000, scoped, tag = 'input window, operand 2, single buffered']
    #allocation8 [shape = 'u8[16384]{0}', space=vmem, size = 0x4000, scoped, tag = 'input window, operand 4, single buffered']
    #allocation9 [shape = 's32[1]{0}', space=sflag, size = 0x4, scoped, tag = 'scoped memory for tpu_custom_call.1']
    #allocation10 [shape = 'u8[4096]{0}', space=vmem, size = 0x1000, scoped, tag = 'output window, operand 0, single buffered']
    %10 = vsyncpa [#allocation3], 0
    %11 = vsyncpa [#allocation6], 0
    %12 = vsyncpa [#allocation9], 0
    %13 = vsyncpa [#allocation4], 0
    // Predicated region
    $region2: #{tpu_custom_call.1} parent=1 // pred_check
      _
    $region3: #{tpu_custom_call.1} parent=1 // pred_check_branch
      %15 = sbr.rel (0) target = $region5
    $region4: #{tpu_custom_call.1} parent=1 // pred_region
      %s17 = ssub.s32 128, 128
      %18 = vsyncadd [#allocation3], %s17
      %s20 = sshll.u32 [#allocation2], 4
      %s21 = int_to_ptr.vmem [resolvable:$true] %s20
      %23 = dma.hbm_to_vmem [thread:$0]  %s0, 128, %s21, [#allocation3]
    $region5: #{tpu_custom_call.1} parent=1 // pred_fallthru
      _
    // Predicated region
    $region6: #{tpu_custom_call.1} parent=1 // pred_check
      _
    $region7: #{tpu_custom_call.1} parent=1 // pred_check_branch
      %25 = sbr.rel (0) target = $region9
    $region8: #{tpu_custom_call.1} parent=1 // pred_region
      %s27 = ssub.s32 512, 512
      %28 = vsyncadd [#allocation6], %s27
      %s29 = sshll.u32 [#allocation5], 4
      %s30 = int_to_ptr.vmem [resolvable:$true] %s29
      %35 = dma.hbm_to_vmem [thread:$0]  %s1, 512, %s30, [#allocation6], 128, 128, 8
    $region9: #{tpu_custom_call.1} parent=1 // pred_fallthru
      _
    // Predicated region
    $region10: #{tpu_custom_call.1} parent=1 // pred_check
      _
    $region11: #{tpu_custom_call.1} parent=1 // pred_check_branch
      %37 = sbr.rel (0) target = $region13
    $region12: #{tpu_custom_call.1} parent=1 // pred_region
      %s39 = ssub.s32 512, 512
      %40 = vsyncadd [#allocation6], %s39
      %s41 = sshll.u32 [#allocation7], 4
      %s42 = int_to_ptr.vmem [resolvable:$true] %s41
      %47 = dma.hbm_to_vmem [thread:$0]  %s2, 512, %s42, [#allocation6], 128, 128, 8
    $region13: #{tpu_custom_call.1} parent=1 // pred_fallthru
      _
    // Predicated region
    $region14: #{tpu_custom_call.1} parent=1 // pred_check
      _
    $region15: #{tpu_custom_call.1} parent=1 // pred_check_branch
      %49 = sbr.rel (0) target = $region17
    $region16: #{tpu_custom_call.1} parent=1 // pred_region
      _
    $region17: #{tpu_custom_call.1} parent=1 // pred_fallthru
      _
    // Predicated region
    $region18: #{tpu_custom_call.1} parent=1 // pred_check
      _
    $region19: #{tpu_custom_call.1} parent=1 // pred_check_branch
      %51 = sbr.rel (0) target = $region21
    $region20: #{tpu_custom_call.1} parent=1 // pred_region
      %s53 = ssub.s32 512, 512
      %54 = vsyncadd [#allocation9], %s53
      %s55 = sshll.u32 [#allocation8], 4
      %s56 = int_to_ptr.vmem [resolvable:$true] %s55
      %61 = dma.hbm_to_vmem [thread:$0]  %s4, 512, %s56, [#allocation9], 128, 128, 8
    $region21: #{tpu_custom_call.1} parent=1 // pred_fallthru
      _
    // Predicated region
    $region22: #{tpu_custom_call.1} parent=1 // pred_check
      _
    $region23: #{tpu_custom_call.1} parent=1 // pred_check_branch
      %63 = sbr.rel (0) target = $region25
    $region24: #{tpu_custom_call.1} parent=1 // pred_region
      %64 = dma.done [#allocation3], 128
    $region25: #{tpu_custom_call.1} parent=1 // pred_fallthru
      _
    // Predicated region
    $region26: #{tpu_custom_call.1} parent=1 // pred_check
      _
    $region27: #{tpu_custom_call.1} parent=1 // pred_check_branch
      %66 = sbr.rel (0) target = $region29
    $region28: #{tpu_custom_call.1} parent=1 // pred_region
      %67 = dma.done [#allocation6], 512
    $region29: #{tpu_custom_call.1} parent=1 // pred_fallthru
      _
    // Predicated region
    $region30: #{tpu_custom_call.1} parent=1 // pred_check
      _
    $region31: #{tpu_custom_call.1} parent=1 // pred_check_branch
      %69 = sbr.rel (0) target = $region33
    $region32: #{tpu_custom_call.1} parent=1 // pred_region
      %70 = dma.done [#allocation6], 512
    $region33: #{tpu_custom_call.1} parent=1 // pred_fallthru
      _
    // Predicated region
    $region34: #{tpu_custom_call.1} parent=1 // pred_check
      _
    $region35: #{tpu_custom_call.1} parent=1 // pred_check_branch
      %72 = sbr.rel (0) target = $region37
    $region36: #{tpu_custom_call.1} parent=1 // pred_region
      %73 = dma.done [#allocation9], 512
    $region37: #{tpu_custom_call.1} parent=1 // pred_fallthru
      _
    %v74 = vld [vmem:[#allocation2] sm:$0xff]
    %v75 = vlaneseq
    %v76 = vand.u32 %v75, 127
    %77 = vset.pattern.permute.xlu0 0
    %78 = vperm.xlu0 %77, %v74
    %v79 = vpop.permute.xlu0 %78
    %vm80 = vcmp.eq.s32.totalorder %v79, %v76
    %v81 = vsel %vm80, 1, 0
    %v82 = vcvt.s32.f32 %v81
    %v83 = vadd.f32 %v82, 0.0
    %84 = vset.pattern.permute.xlu0 1
    %85 = vperm.xlu0 %84, %v74
    %v86 = vpop.permute.xlu0 %85
    %vm87 = vcmp.eq.s32.totalorder %v86, %v76
    %v88 = vsel %vm87, 1, 0
    %v89 = vcvt.s32.f32 %v88
    %v90 = vadd.f32 %v83, %v89
    %91 = vset.pattern.permute.xlu0 2
    %92 = vperm.xlu0 %91, %v74
    %v93 = vpop.permute.xlu0 %92
    %vm94 = vcmp.eq.s32.totalorder %v93, %v76
    %v95 = vsel %vm94, 1, 0
    %v96 = vcvt.s32.f32 %v95
    %v97 = vadd.f32 %v90, %v96
    %98 = vset.pattern.permute.xlu0 3
    %99 = vperm.xlu0 %98, %v74
    %v100 = vpop.permute.xlu0 %99
    %vm101 = vcmp.eq.s32.totalorder %v100, %v76
    %v102 = vsel %vm101, 1, 0
    %v103 = vcvt.s32.f32 %v102
    %v104 = vadd.f32 %v97, %v103
    %105 = vset.pattern.permute.xlu0 4
    %106 = vperm.xlu0 %105, %v74
    %v107 = vpop.permute.xlu0 %106
    %vm108 = vcmp.eq.s32.totalorder %v107, %v76
    %v109 = vsel %vm108, 1, 0
    %v110 = vcvt.s32.f32 %v109
    %v111 = vadd.f32 %v104, %v110
    %112 = vset.pattern.permute.xlu0 5
    %113 = vperm.xlu0 %112, %v74
    %v114 = vpop.permute.xlu0 %113
    %vm115 = vcmp.eq.s32.totalorder %v114, %v76
    %v116 = vsel %vm115, 1, 0
    %v117 = vcvt.s32.f32 %v116
    %v118 = vadd.f32 %v111, %v117
    %119 = vset.pattern.permute.xlu0 6
    %120 = vperm.xlu0 %119, %v74
    %v121 = vpop.permute.xlu0 %120
    %vm122 = vcmp.eq.s32.totalorder %v121, %v76
    %v123 = vsel %vm122, 1, 0
    %v124 = vcvt.s32.f32 %v123
    %v125 = vadd.f32 %v118, %v124
    %126 = vset.pattern.permute.xlu0 7
    %127 = vperm.xlu0 %126, %v74
    %v128 = vpop.permute.xlu0 %127
    %vm129 = vcmp.eq.s32.totalorder %v128, %v76
    %v130 = vsel %vm129, 1, 0
    %v131 = vcvt.s32.f32 %v130
    %v132 = vadd.f32 %v125, %v131
    %v133 = vmul.f32 %v132, 0.125
    %v134 = vld [vmem:[#allocation5] sm:$0xff]
    %v135 = vld [vmem:[#allocation5 + $0x8] sm:$0xff]
    %v136 = vld [vmem:[#allocation5 + $0x10] sm:$0xff]
    %v137 = vld [vmem:[#allocation5 + $0x18] sm:$0xff]
    %vm138 = vcmask 261120
    %v140 = vsel %vm138, %v133, 0
    %142 = vmatprep.subr.mxu0 0.0
    %143 = vmatpush1.msra.mxu0 %v134
    %144 = vmatprep.subr.mxu0 0.0
    %145 = vmatpush1.msra.mxu0 %v135
    %146 = vmatprep.subr.mxu0 0.0
    %147 = vmatpush1.msra.mxu0 %v136
    %148 = vmatprep.subr.mxu0 0.0
    %149 = vmatpush1.msra.mxu0 %v137
    %150 = vmatprep.subr.mxu0 0.0
    %151 = vmatpush1.msra.mxu0 0.0
    %152 = vmatprep.subr.mxu0 0.0
    %153 = vmatpush1.msra.mxu0 0.0
    %154 = vmatprep.subr.mxu0 0.0
    %155 = vmatpush1.msra.mxu0 0.0
    %156 = vmatprep.subr.mxu0 0.0
    %157 = vmatpush1.msra.mxu0 0.0
    %158 = vmatprep.subr.mxu0 0.0
    %159 = vmatpush1.msra.mxu0 0.0
    %160 = vmatprep.subr.mxu0 0.0
    %161 = vmatpush1.msra.mxu0 0.0
    %162 = vmatprep.subr.mxu0 0.0
    %163 = vmatpush1.msra.mxu0 0.0
    %164 = vmatprep.subr.mxu0 0.0
    %165 = vmatpush1.msra.mxu0 0.0
    %166 = vmatprep.subr.mxu0 0.0
    %167 = vmatpush1.msra.mxu0 0.0
    %168 = vmatprep.subr.mxu0 0.0
    %169 = vmatpush1.msra.mxu0 0.0
    %170 = vmatprep.subr.mxu0 0.0
    %171 = vmatpush1.msra.mxu0 0.0
    %172 = vmatprep.subr.mxu0 0.0
    %173 = vmatpush1.msra.mxu0 0.0
    %174 = vmatprep.subr.mxu0 0.0
    %175 = vmatpush1.msra.mxu0 0.0
    %176 = vmatprep.subr.mxu0 0.0
    %177 = vmatpush1.msra.mxu0 0.0
    %178 = vmatprep.subr.mxu0 0.0
    %179 = vmatpush1.msra.mxu0 0.0
    %180 = vmatprep.subr.mxu0 0.0
    %181 = vmatpush1.msra.mxu0 0.0
    %182 = vmatprep.subr.mxu0 0.0
    %183 = vmatpush1.msra.mxu0 0.0
    %184 = vmatprep.subr.mxu0 0.0
    %185 = vmatpush1.msra.mxu0 0.0
    %186 = vmatprep.subr.mxu0 0.0
    %187 = vmatpush1.msra.mxu0 0.0
    %188 = vmatprep.subr.mxu0 0.0
    %189 = vmatpush1.msra.mxu0 0.0
    %190 = vmatprep.subr.mxu0 0.0
    %191 = vmatpush1.msra.mxu0 0.0
    %192 = vmatprep.subr.mxu0 0.0
    %193 = vmatpush1.msra.mxu0 0.0
    %194 = vmatprep.subr.mxu0 0.0
    %195 = vmatpush1.msra.mxu0 0.0
    %196 = vmatprep.subr.mxu0 0.0
    %197 = vmatpush1.msra.mxu0 0.0
    %198 = vmatprep.subr.mxu0 0.0
    %199 = vmatpush1.msra.mxu0 0.0
    %200 = vmatprep.subr.mxu0 0.0
    %201 = vmatpush1.msra.mxu0 0.0
    %202 = vmatprep.subr.mxu0 0.0
    %203 = vmatpush1.msra.mxu0 0.0
    %204 = vmatprep.subr.mxu0 0.0
    %205 = vmatpush1.msra.mxu0 0.0
    %206 = vmatprep.mubr.f32.mxu0 0.0
    %207 = vmatmul.mubr.f32.gmra.mrb[0].mxu0 %v140
    %v208 = vpop.f32.mrb[0].mxu0
    %v209 = vadd.f32 0.0, %v208
    %v210 = vpop.f32.mrb[0].mxu0
    %211 = vdwg.mxu0
    %v212 = vld [vmem:[#allocation7] sm:$0xff]
    %v213 = vld [vmem:[#allocation7 + $0x8] sm:$0xff]
    %v214 = vld [vmem:[#allocation7 + $0x10] sm:$0xff]
    %v215 = vld [vmem:[#allocation7 + $0x18] sm:$0xff]
    %v216 = vld [vmem:[%s3] sm:$0x1]
    %v218 = vlaneseq
    %v219 = vshrl.u32 %v218, 7
    %v220 = vsub.s32 0, %v219
    %v221 = vrot.slane %v216, %v220
    %v224 = vsel %vm138, %v209, 0
    %226 = vmatprep.subr.mxu0 0.0
    %227 = vmatpush1.msra.mxu0 %v212
    %228 = vmatprep.subr.mxu0 0.0
    %229 = vmatpush1.msra.mxu0 %v213
    %230 = vmatprep.subr.mxu0 0.0
    %231 = vmatpush1.msra.mxu0 %v214
    %232 = vmatprep.subr.mxu0 0.0
    %233 = vmatpush1.msra.mxu0 %v215
    %234 = vmatprep.subr.mxu0 0.0
    %235 = vmatpush1.msra.mxu0 0.0
    %236 = vmatprep.subr.mxu0 0.0
    %237 = vmatpush1.msra.mxu0 0.0
    %238 = vmatprep.subr.mxu0 0.0
    %239 = vmatpush1.msra.mxu0 0.0
    %240 = vmatprep.subr.mxu0 0.0
    %241 = vmatpush1.msra.mxu0 0.0
    %242 = vmatprep.subr.mxu0 0.0
    %243 = vmatpush1.msra.mxu0 0.0
    %244 = vmatprep.subr.mxu0 0.0
    %245 = vmatpush1.msra.mxu0 0.0
    %246 = vmatprep.subr.mxu0 0.0
    %247 = vmatpush1.msra.mxu0 0.0
    %248 = vmatprep.subr.mxu0 0.0
    %249 = vmatpush1.msra.mxu0 0.0
    %250 = vmatprep.subr.mxu0 0.0
    %251 = vmatpush1.msra.mxu0 0.0
    %252 = vmatprep.subr.mxu0 0.0
    %253 = vmatpush1.msra.mxu0 0.0
    %254 = vmatprep.subr.mxu0 0.0
    %255 = vmatpush1.msra.mxu0 0.0
    %256 = vmatprep.subr.mxu0 0.0
    %257 = vmatpush1.msra.mxu0 0.0
    %258 = vmatprep.subr.mxu0 0.0
    %259 = vmatpush1.msra.mxu0 0.0
    %260 = vmatprep.subr.mxu0 0.0
    %261 = vmatpush1.msra.mxu0 0.0
    %262 = vmatprep.subr.mxu0 0.0
    %263 = vmatpush1.msra.mxu0 0.0
    %264 = vmatprep.subr.mxu0 0.0
    %265 = vmatpush1.msra.mxu0 0.0
    %266 = vmatprep.subr.mxu0 0.0
    %267 = vmatpush1.msra.mxu0 0.0
    %268 = vmatprep.subr.mxu0 0.0
    %269 = vmatpush1.msra.mxu0 0.0
    %270 = vmatprep.subr.mxu0 0.0
    %271 = vmatpush1.msra.mxu0 0.0
    %272 = vmatprep.subr.mxu0 0.0
    %273 = vmatpush1.msra.mxu0 0.0
    %274 = vmatprep.subr.mxu0 0.0
    %275 = vmatpush1.msra.mxu0 0.0
    %276 = vmatprep.subr.mxu0 0.0
    %277 = vmatpush1.msra.mxu0 0.0
    %278 = vmatprep.subr.mxu0 0.0
    %279 = vmatpush1.msra.mxu0 0.0
    %280 = vmatprep.subr.mxu0 0.0
    %281 = vmatpush1.msra.mxu0 0.0
    %282 = vmatprep.subr.mxu0 0.0
    %283 = vmatpush1.msra.mxu0 0.0
    %284 = vmatprep.subr.mxu0 0.0
    %285 = vmatpush1.msra.mxu0 0.0
    %286 = vmatprep.subr.mxu0 0.0
    %287 = vmatpush1.msra.mxu0 0.0
    %288 = vmatprep.subr.mxu0 0.0
    %289 = vmatpush1.msra.mxu0 0.0
    %290 = vmatprep.mubr.f32.mxu0 0.0
    %291 = vmatmul.mubr.f32.gmra.mrb[0].mxu0 %v224
    %v292 = vpop.f32.mrb[0].mxu0
    %v293 = vadd.f32 %v221, %v292
    %v294 = vpop.f32.mrb[0].mxu0
    %295 = vdwg.mxu0
    %v296 = vtanh.pop %v293
    %v297 = vmul.f32 %v296, %v296
    %v298 = vsel %vm138, %v297, 0.0
    %299 = vadd.xlane.f32.xlu0 %v298
    %v300 = vpop.xlane.xlu0 %299
    %v301 = vmax.f32 %v300, 1e-24
    %v302 = vrsqrt.pop %v301
    %v303 = vmul.f32 %v296, %v302
    %v304 = vld [vmem:[#allocation8] sm:$0xff]
    %v305 = vld [vmem:[#allocation8 + $0x8] sm:$0xff]
    %v306 = vld [vmem:[#allocation8 + $0x10] sm:$0xff]
    %v307 = vld [vmem:[#allocation8 + $0x18] sm:$0xff]
    %v309 = vsel %vm138, %v303, 0
    %311 = vmatprep.subr.mxu0 0.0
    %312 = vmatpush1.msra.mxu0 %v304
    %313 = vmatprep.subr.mxu0 0.0
    %314 = vmatpush1.msra.mxu0 %v305
    %315 = vmatprep.subr.mxu0 0.0
    %316 = vmatpush1.msra.mxu0 %v306
    %317 = vmatprep.subr.mxu0 0.0
    %318 = vmatpush1.msra.mxu0 %v307
    %319 = vmatprep.subr.mxu0 0.0
    %320 = vmatpush1.msra.mxu0 0.0
    %321 = vmatprep.subr.mxu0 0.0
    %322 = vmatpush1.msra.mxu0 0.0
    %323 = vmatprep.subr.mxu0 0.0
    %324 = vmatpush1.msra.mxu0 0.0
    %325 = vmatprep.subr.mxu0 0.0
    %326 = vmatpush1.msra.mxu0 0.0
    %327 = vmatprep.subr.mxu0 0.0
    %328 = vmatpush1.msra.mxu0 0.0
    %329 = vmatprep.subr.mxu0 0.0
    %330 = vmatpush1.msra.mxu0 0.0
    %331 = vmatprep.subr.mxu0 0.0
    %332 = vmatpush1.msra.mxu0 0.0
    %333 = vmatprep.subr.mxu0 0.0
    %334 = vmatpush1.msra.mxu0 0.0
    %335 = vmatprep.subr.mxu0 0.0
    %336 = vmatpush1.msra.mxu0 0.0
    %337 = vmatprep.subr.mxu0 0.0
    %338 = vmatpush1.msra.mxu0 0.0
    %339 = vmatprep.subr.mxu0 0.0
    %340 = vmatpush1.msra.mxu0 0.0
    %341 = vmatprep.subr.mxu0 0.0
    %342 = vmatpush1.msra.mxu0 0.0
    %343 = vmatprep.subr.mxu0 0.0
    %344 = vmatpush1.msra.mxu0 0.0
    %345 = vmatprep.subr.mxu0 0.0
    %346 = vmatpush1.msra.mxu0 0.0
    %347 = vmatprep.subr.mxu0 0.0
    %348 = vmatpush1.msra.mxu0 0.0
    %349 = vmatprep.subr.mxu0 0.0
    %350 = vmatpush1.msra.mxu0 0.0
    %351 = vmatprep.subr.mxu0 0.0
    %352 = vmatpush1.msra.mxu0 0.0
    %353 = vmatprep.subr.mxu0 0.0
    %354 = vmatpush1.msra.mxu0 0.0
    %355 = vmatprep.subr.mxu0 0.0
    %356 = vmatpush1.msra.mxu0 0.0
    %357 = vmatprep.subr.mxu0 0.0
    %358 = vmatpush1.msra.mxu0 0.0
    %359 = vmatprep.subr.mxu0 0.0
    %360 = vmatpush1.msra.mxu0 0.0
    %361 = vmatprep.subr.mxu0 0.0
    %362 = vmatpush1.msra.mxu0 0.0
    %363 = vmatprep.subr.mxu0 0.0
    %364 = vmatpush1.msra.mxu0 0.0
    %365 = vmatprep.subr.mxu0 0.0
    %366 = vmatpush1.msra.mxu0 0.0
    %367 = vmatprep.subr.mxu0 0.0
    %368 = vmatpush1.msra.mxu0 0.0
    %369 = vmatprep.subr.mxu0 0.0
    %370 = vmatpush1.msra.mxu0 0.0
    %371 = vmatprep.subr.mxu0 0.0
    %372 = vmatpush1.msra.mxu0 0.0
    %373 = vmatprep.subr.mxu0 0.0
    %374 = vmatpush1.msra.mxu0 0.0
    %375 = vmatprep.mubr.f32.mxu0 0.0
    %376 = vmatmul.mubr.f32.gmra.mrb[0].mxu0 %v309
    %v377 = vpop.f32.mrb[0].mxu0
    %v378 = vadd.f32 0.0, %v377
    %v379 = vpop.f32.mrb[0].mxu0
    %380 = vdwg.mxu0
    %381 = vst [vmem:[#allocation10] sm:$0xff] %v378
    // Predicated region
    $region38: #{tpu_custom_call.1} parent=1 // pred_check
      _
    $region39: #{tpu_custom_call.1} parent=1 // pred_check_branch
      %383 = sbr.rel (0) target = $region41
    $region40: #{tpu_custom_call.1} parent=1 // pred_region
      %s385 = ssub.s32 128, 128
      %386 = vsyncadd [#allocation4], %s385
      %s388 = sshll.u32 [#allocation10], 4
      %s389 = int_to_ptr.vmem [resolvable:$true] %s388
      %391 = dma.vmem_to_hbm [thread:$0]  %s389, 128, %s5, [#allocation4]
    $region41: #{tpu_custom_call.1} parent=1 // pred_fallthru
      _
    // Predicated region
    $region42: #{tpu_custom_call.1} parent=1 // pred_check
      _
    $region43: #{tpu_custom_call.1} parent=1 // pred_check_branch
      %393 = sbr.rel (0) target = $region45
    $region44: #{tpu_custom_call.1} parent=1 // pred_region
      %394 = dma.done [#allocation4], 128
    $region45: #{tpu_custom_call.1} parent=1 // pred_fallthru
      _
    %395 = vsyncpa [#allocation3], 1
    %396 = vsyncpa [#allocation6], 1
    %397 = vsyncpa [#allocation9], 1
    %398 = vsyncpa [#allocation4], 1

</llo_original>
